<compile_context>
chip_gen: v7x
topology: tpu7x:2x2x1
jax: 0.10.0
libtpu: 0.0.40
codegen_flags: <defaults>
</compile_context>

<pallas_src>
import functools
import math

import jax
import jax.numpy as jnp
from jax import lax
from jax.experimental import pallas as pl
from jax.experimental.pallas import tpu as pltpu

EPS = 1e-5  # nn.GroupNorm default


# -----------------------------------------------------------------------------
# Generation-aware VMEM budgets.
# -----------------------------------------------------------------------------
def _vmem_budgets():
    """Returns (vmem_limit_bytes, pipeline_budget_bytes)."""
    cap = 128 * 1024 * 1024
    try:
        cap = int(pltpu.get_tpu_info().vmem_capacity_bytes)
    except Exception:
        pass
    if cap >= 128 * 1024 * 1024:
        # v5e / v6e: 128 MiB physical — raise well above the scoped default so
        # mid-size samples stay on the fused single-pass path (1R+1W vs 2R+1W).
        return 96 * 1024 * 1024, 40 * 1024 * 1024
    # v7x: 64 MiB physical per TC — leave headroom for compiler temps created
    # by the whole-block f32 upcast and x*x.
    return 48 * 1024 * 1024, 20 * 1024 * 1024


# -----------------------------------------------------------------------------
# Layout helpers.
# -----------------------------------------------------------------------------
def _sublane_repack(x3, gamma, beta):
    """(N, C, HW) -> (N, C*k, HW/k) when C under-fills the sublane dimension.

    GroupNorm(1, C) statistics are over all C*HW elements, so the regrouping is
    exact as long as gamma/beta are repeated k times per channel.
    """
    N, C, HW = x3.shape
    sub = {4: 8, 2: 16, 1: 32}.get(x3.dtype.itemsize, 8)
    if C >= sub:
        return x3, gamma, beta
    k = sub // math.gcd(C, sub)
    if k > 1 and HW % k == 0 and (HW // k) % 128 == 0:
        return (x3.reshape(N, C * k, HW // k),
                jnp.repeat(gamma, k),
                jnp.repeat(beta, k))
    return x3, gamma, beta


def _choose_nb(N, C, HW, itemsize, budget_bytes):
    """Samples per whole-sample block; 0 if even one sample blows the budget."""
    # in + out, double-buffered, plus ~2 f32-sized temps for the upcast / x*x.
    per_sample = C * HW * (4 * itemsize + 8)
    if per_sample > budget_bytes:
        return 0
    target = min(budget_bytes, 4 * 1024 * 1024)   # ~2-4 MiB pipelined blocks
    nb_max = max(1, target // per_sample)
    nb = 1
    for d in range(1, N + 1):
        if N % d == 0 and d <= nb_max:
            nb = d
    # Keep >= 2 grid steps when N >= 2 (v7x has 2 TCs; also enables overlap).
    if N >= 2 and N // nb < 2:
        nb = 1
        for d in range(1, N // 2 + 1):
            if N % d == 0:
                nb = d
    return nb


def _choose_tile(HW, budget_bytes, bytes_per_hw):
    """Largest spatial tile that is a multiple of 128 dividing HW (or HW)."""
    max_thw = budget_bytes // max(bytes_per_hw, 1)
    if max_thw >= HW:
        return HW
    cand = min((max_thw // 128) * 128, HW)
    while cand >= 128:
        if HW % cand == 0:
            return cand
        cand -= 128
    # TODO(synk): HW has no 128-multiple divisor under budget; fall back to the
    # full row and rely on vmem_limit_bytes (masked ragged tiles not implemented).
    return HW


# -----------------------------------------------------------------------------
# Path 1: whole-sample (batched) fused stats + normalize kernel.
# -----------------------------------------------------------------------------
def _gn1_whole_kernel(x_ref, g_ref, b_ref, o_ref):
    # x_ref: (Nb, C, HW) lane-dense block; g_ref/b_ref: (C, 1).
    xf = x_ref[...].astype(jnp.float32)
    inv_n = 1.0 / float(xf.shape[1] * xf.shape[2])

    # Single pass: per-sample sum and sum-of-squares (f32 accumulation).
    # TODO(synk): E[x^2]-E[x]^2 can cancel when |mean| >> std; a shifted/Welford
    # accumulation would be more robust but costs an extra pass over the tile.
    s = jnp.sum(xf, axis=(1, 2), keepdims=True)             # (Nb, 1, 1)
    ss = jnp.sum(xf * xf, axis=(1, 2), keepdims=True)       # (Nb, 1, 1)
    mean = s * inv_n
    var = jnp.maximum(ss * inv_n - mean * mean, 0.0)
    inv = lax.rsqrt(var + EPS)

    gamma = g_ref[...].astype(jnp.float32)                  # (C, 1)
    beta = b_ref[...].astype(jnp.float32)                   # (C, 1)
    scale = gamma[None, :, :] * inv                         # (Nb, C, 1)
    shift = beta[None, :, :] - mean * scale                 # (Nb, C, 1)

    # Folded FMA in f32; cast only at the final store.
    o_ref[...] = (xf * scale + shift).astype(o_ref.dtype)


def _gn1_whole(x3, gamma, beta, nb, vmem_limit):
    N, C, HW = x3.shape
    g = gamma.reshape(C, 1)
    b = beta.reshape(C, 1)
    return pl.pallas_call(
        _gn1_whole_kernel,
        out_shape=jax.ShapeDtypeStruct((N, C, HW), x3.dtype),
        grid_spec=pltpu.PrefetchScalarGridSpec(
            num_scalar_prefetch=0,
            grid=(N // nb,),
            in_specs=[
                pl.BlockSpec((nb, C, HW), lambda n: (n, 0, 0)),
                pl.BlockSpec((C, 1), lambda n: (0, 0)),
                pl.BlockSpec((C, 1), lambda n: (0, 0)),
            ],
            out_specs=pl.BlockSpec((nb, C, HW), lambda n: (n, 0, 0)),
        ),
        compiler_params=pltpu.CompilerParams(
            dimension_semantics=("parallel",),
            vmem_limit_bytes=vmem_limit,
        ),
    )(x3, g, b)


# -----------------------------------------------------------------------------
# Path 2: spatially tiled two-pass path for samples too large for VMEM.
#   pass 1: per-sample sum / sum-of-squares, reduced over (larger) spatial tiles
#   pass 2: normalize sweep; scale/shift are derived in-kernel from the stats.
# -----------------------------------------------------------------------------
def _gn1_stats_kernel(x_ref, sum_ref, sq_ref):
    @pl.when(pl.program_id(1) == 0)
    def _():
        sum_ref[...] = jnp.zeros_like(sum_ref)
        sq_ref[...] = jnp.zeros_like(sq_ref)

    xf = x_ref[...].astype(jnp.float32)
    sum_ref[...] += jnp.sum(xf, keepdims=True)
    sq_ref[...] += jnp.sum(xf * xf, keepdims=True)


def _gn1_norm_kernel(x_ref, sum_ref, sq_ref, g_ref, b_ref, o_ref, *, inv_cnt):
    xf = x_ref[...].astype(jnp.float32)                     # (1, C, t_hw)
    mean = sum_ref[...] * inv_cnt                           # (1, 1, 1)
    var = jnp.maximum(sq_ref[...] * inv_cnt - mean * mean, 0.0)
    inv = lax.rsqrt(var + EPS)
    gamma = g_ref[...].astype(jnp.float32)                  # (C, 1)
    beta = b_ref[...].astype(jnp.float32)
    scale = gamma[None, :, :] * inv                         # (1, C, 1)
    shift = beta[None, :, :] - mean * scale
    o_ref[...] = (xf * scale + shift).astype(o_ref.dtype)


def _gn1_tiled(x3, gamma, beta, t_stats, t_norm, vmem_limit):
    N, C, HW = x3.shape
    g = gamma.reshape(C, 1)
    b = beta.reshape(C, 1)

    sums, sqs = pl.pallas_call(
        _gn1_stats_kernel,
        out_shape=(
            jax.ShapeDtypeStruct((N, 1, 1), jnp.float32),
            jax.ShapeDtypeStruct((N, 1, 1), jnp.float32),
        ),
        grid_spec=pltpu.PrefetchScalarGridSpec(
            num_scalar_prefetch=0,
            grid=(N, HW // t_stats),
            in_specs=[pl.BlockSpec((1, C, t_stats), lambda n, t: (n, 0, t))],
            out_specs=[
                pl.BlockSpec((1, 1, 1), lambda n, t: (n, 0, 0)),
                pl.BlockSpec((1, 1, 1), lambda n, t: (n, 0, 0)),
            ],
        ),
        compiler_params=pltpu.CompilerParams(
            dimension_semantics=("parallel", "arbitrary"),
            vmem_limit_bytes=vmem_limit,
        ),
    )(x3)

    norm_kernel = functools.partial(_gn1_norm_kernel, inv_cnt=1.0 / float(C * HW))
    return pl.pallas_call(
        norm_kernel,
        out_shape=jax.ShapeDtypeStruct((N, C, HW), x3.dtype),
        grid_spec=pltpu.PrefetchScalarGridSpec(
            num_scalar_prefetch=0,
            grid=(N, HW // t_norm),
            in_specs=[
                pl.BlockSpec((1, C, t_norm), lambda n, t: (n, 0, t)),
                pl.BlockSpec((1, 1, 1), lambda n, t: (n, 0, 0)),
                pl.BlockSpec((1, 1, 1), lambda n, t: (n, 0, 0)),
                pl.BlockSpec((C, 1), lambda n, t: (0, 0)),
                pl.BlockSpec((C, 1), lambda n, t: (0, 0)),
            ],
            out_specs=pl.BlockSpec((1, C, t_norm), lambda n, t: (n, 0, t)),
        ),
        compiler_params=pltpu.CompilerParams(
            dimension_semantics=("parallel", "parallel"),
            vmem_limit_bytes=vmem_limit,
        ),
    )(x3, sums, sqs, g, b)


# -----------------------------------------------------------------------------
# Fused PreNorm + 1x1-conv projection (fn as a channel-wise linear map).
# -----------------------------------------------------------------------------
def _gn1_conv1x1_kernel(x_ref, g_ref, b_ref, w_ref, cb_ref, o_ref):
    # x_ref: (1, C, HW); w_ref: (Cout, C); cb_ref: (Cout, 1); o_ref: (1, Cout, HW)
    xf = x_ref[...].astype(jnp.float32)
    inv_n = 1.0 / float(xf.shape[1] * xf.shape[2])
    s = jnp.sum(xf)
    ss = jnp.sum(xf * xf)
    mean = s * inv_n
    var = jnp.maximum(ss * inv_n - mean * mean, 0.0)
    inv = lax.rsqrt(var + EPS)

    gamma = g_ref[...].astype(jnp.float32)                  # (C, 1)
    beta = b_ref[...].astype(jnp.float32)
    scale = gamma * inv                                     # (C, 1)
    shift = beta - mean * scale                             # (C, 1)

    # Fold the per-channel affine + normalization into the projection:
    #   y = W (x*scale + shift) + cb = (W*scale^T) x + (W shift + cb)
    wf = w_ref[...].astype(jnp.float32)                     # (Cout, C)
    w_eff = wf * scale.reshape(1, -1)                       # (Cout, C)
    b_eff = jnp.sum(wf * shift.reshape(1, -1), axis=1, keepdims=True)
    b_eff = b_eff + cb_ref[...].astype(jnp.float32)         # (Cout, 1)

    y = jnp.dot(w_eff, xf[0], preferred_element_type=jnp.float32) + b_eff
    o_ref[...] = y[None].astype(o_ref.dtype)


def prenorm_conv1x1(x, gamma, beta, w, b):
    """PreNorm where fn is a 1x1 conv / pointwise linear (Conv2d(C, Cout, 1))."""
    N, C, H, W = x.shape
    Cout = w.shape[0]
    HW = H * W
    x3 = x.reshape(N, C, HW)
    vmem_limit, budget = _vmem_budgets()
    per_sample = C * HW * (4 * x.dtype.itemsize + 8) + Cout * HW * (2 * x.dtype.itemsize + 4)
    if per_sample > budget:
        # TODO(synk): for very large samples run the unfused tiled GroupNorm and
        # apply the projection outside; a fused variant would need an HW-tiled,
        # weight-resident matmul path.
        y = groupnorm1(x, gamma, beta).astype(jnp.float32)
        out = jnp.einsum('oc,nchw->nohw', w.astype(jnp.float32), y)
        return (out + b.reshape(1, Cout, 1, 1)).astype(x.dtype)

    out3 = pl.pallas_call(
        _gn1_conv1x1_kernel,
        out_shape=jax.ShapeDtypeStruct((N, Cout, HW), x.dtype),
        grid_spec=pltpu.PrefetchScalarGridSpec(
            num_scalar_prefetch=0,
            grid=(N,),
            in_specs=[
                pl.BlockSpec((1, C, HW), lambda n: (n, 0, 0)),
                pl.BlockSpec((C, 1), lambda n: (0, 0)),
                pl.BlockSpec((C, 1), lambda n: (0, 0)),
                pl.BlockSpec((Cout, C), lambda n: (0, 0)),
                pl.BlockSpec((Cout, 1), lambda n: (0, 0)),
            ],
            out_specs=pl.BlockSpec((1, Cout, HW), lambda n: (n, 0, 0)),
        ),
        compiler_params=pltpu.CompilerParams(
            dimension_semantics=("parallel",),
            vmem_limit_bytes=vmem_limit,
        ),
    )(x3, gamma.reshape(C, 1), beta.reshape(C, 1), w, b.reshape(Cout, 1))
    return out3.reshape(N, Cout, H, W)


# -----------------------------------------------------------------------------
# GroupNorm(1, C) on NCHW and the PreNorm wrapper.
# -----------------------------------------------------------------------------
def groupnorm1(x, gamma, beta, *, pipeline_budget_bytes=None):
    """GroupNorm(num_groups=1, C) on NCHW input via Pallas (lane-dense layout)."""
    N, C, H, W = x.shape
    HW = H * W
    vmem_limit, budget = _vmem_budgets()
    if pipeline_budget_bytes is not None:
        budget = pipeline_budget_bytes

    x3 = x.reshape(N, C, HW)                 # metadata-only reshape (contiguous NCHW)
    x3p, gp, bp = _sublane_repack(x3, gamma, beta)
    Np, Cp, HWp = x3p.shape

    nb = _choose_nb(Np, Cp, HWp, x.dtype.itemsize, budget)
    if nb >= 1:
        # TODO(synk): when N == 1 this leaves one v7x TensorCore idle; a spatial
        # split of the single-sample stats/normalize would recover the 2nd TC.
        out3 = _gn1_whole(x3p, gp, bp, nb, vmem_limit)
    else:
        itemsize = x.dtype.itemsize
        # Stats pass: output block is (1,1,1) -> input-only pipelined footprint.
        t_stats = _choose_tile(HWp, budget, Cp * (2 * itemsize + 8))
        # Normalize pass: in + out double-buffered + f32 temps.
        t_norm = _choose_tile(HWp, budget, Cp * (4 * itemsize + 8))
        out3 = _gn1_tiled(x3p, gp, bp, t_stats, t_norm, vmem_limit)
    return out3.reshape(N, C, H, W)


def prenorm(x, gamma, beta, fn=lambda y: y):
    """PreNorm.forward: fn(GroupNorm(1, dim)(x)).

    # TODO(synk): `fn` is an arbitrary wrapped nn.Module in the original code;
    # it is applied here as a user-supplied JAX callable on the normalized
    # tensor.  When fn is a 1x1-conv / pointwise linear projection, use
    # prenorm_conv1x1(), which fuses the projection into the normalize kernel
    # (no extra HBM round trip of the normalized tensor).
    """
    return fn(groupnorm1(x, gamma, beta))


# -----------------------------------------------------------------------------
# Self-test.
# -----------------------------------------------------------------------------
if __name__ == "__main__":
    key = jax.random.PRNGKey(0)
    k_x, k_g, k_b, k_w, k_wb, k_x2 = jax.random.split(key, 6)

    N, C, H, W = 2, 4, 16, 16
    x = jax.random.normal(k_x, (N, C, H, W), dtype=jnp.float32)
    gamma = jax.random.normal(k_g, (C,), dtype=jnp.float32) * 0.1 + 1.0
    beta = jax.random.normal(k_b, (C,), dtype=jnp.float32) * 0.1

    def gn_ref(xx, g, b):
        mean = jnp.mean(xx, axis=(1, 2, 3), keepdims=True)
        var = jnp.mean((xx - mean) ** 2, axis=(1, 2, 3), keepdims=True)
        y = (xx - mean) / jnp.sqrt(var + EPS)
        return y * g.reshape(1, -1, 1, 1) + b.reshape(1, -1, 1, 1)

    ref = gn_ref(x, gamma, beta)

    # 1) PreNorm with identity fn — fused whole-sample (batched, repacked) path.
    out = prenorm(x, gamma, beta)
    out = jax.block_until_ready(out)
    assert out.shape == x.shape and out.dtype == x.dtype
    assert jnp.allclose(out, ref, atol=1e-5, rtol=1e-5), "whole-sample path mismatch"

    # 2) Tiled two-pass path, forced via a tiny pipeline budget (multi-tile sweep).
    x_big = jax.random.normal(k_x2, (N, C, 32, 32), dtype=jnp.float32)
    ref_big = gn_ref(x_big, gamma, beta)
    out_big = groupnorm1(x_big, gamma, beta, pipeline_budget_bytes=32 * 1024)
    out_big = jax.block_until_ready(out_big)
    assert jnp.allclose(out_big, ref_big, atol=1e-5, rtol=1e-5), "tiled path mismatch"

    # 3) PreNorm with fn = 1x1-conv projection, fully fused (MXU in-kernel).
    Cout = 8
    w = jax.random.normal(k_w, (Cout, C), dtype=jnp.float32) * 0.2
    wb = jax.random.normal(k_wb, (Cout,), dtype=jnp.float32) * 0.1
    ref_conv = jnp.einsum('oc,nchw->nohw', w, ref) + wb.reshape(1, Cout, 1, 1)
    out_conv = prenorm_conv1x1(x, gamma, beta, w, wb)
    out_conv = jax.block_until_ready(out_conv)
    assert out_conv.shape == (N, Cout, H, W)
    assert jnp.allclose(out_conv, ref_conv, atol=1e-4, rtol=1e-4), "fused conv path mismatch"

    print("KERNEL_OK")
</pallas_src>

<mosaic_0001>
module attributes {stable_mosaic.version = 11 : i64} {
  func.func @_gn1_whole_kernel(%arg0: i32, %arg1: memref<1x8x128xf32, #tpu.memory_space<vmem>>, %arg2: memref<8x1xf32, #tpu.memory_space<vmem>>, %arg3: memref<8x1xf32, #tpu.memory_space<vmem>>, %arg4: memref<1x8x128xf32, #tpu.memory_space<vmem>>) attributes {dimension_semantics = [#tpu.dimension_semantics<parallel>], iteration_bounds = array<i64: 2>, scalar_prefetch = 0 : i64, scratch_operands = 0 : i64, tpu.core_type = #tpu.core_type<tc>, window_params = [{transform_indices = @transform_0, window_bounds = array<i64: 1, 8, 128>}, {pipeline_mode = #tpu.pipeline_mode<synchronous>, transform_indices = @transform_1, window_bounds = array<i64: 8, 1>}, {pipeline_mode = #tpu.pipeline_mode<synchronous>, transform_indices = @transform_2, window_bounds = array<i64: 8, 1>}, {transform_indices = @transform_3, window_bounds = array<i64: 1, 8, 128>}]} {
    %c0 = arith.constant 0 : index
    %c0_0 = arith.constant 0 : index
    %c0_1 = arith.constant 0 : index
    %0 = vector.load %arg1[%c0, %c0_0, %c0_1] : memref<1x8x128xf32, #tpu.memory_space<vmem>>, vector<1x8x128xf32>
    %cst = arith.constant dense<0.000000e+00> : vector<1xf32>
    %1 = vector.multi_reduction <add>, %0, %cst [1, 2] : vector<1x8x128xf32> to vector<1xf32>
    %2 = vector.shape_cast %1 : vector<1xf32> to vector<1x1x1xf32>
    %3 = arith.mulf %0, %0 : vector<1x8x128xf32>
    %cst_2 = arith.constant dense<0.000000e+00> : vector<1xf32>
    %4 = vector.multi_reduction <add>, %3, %cst_2 [1, 2] : vector<1x8x128xf32> to vector<1xf32>
    %5 = vector.shape_cast %4 : vector<1xf32> to vector<1x1x1xf32>
    %cst_3 = arith.constant 9.765625E-4 : f32
    %6 = vector.broadcast %cst_3 : f32 to vector<1x1x1xf32>
    %7 = arith.mulf %2, %6 : vector<1x1x1xf32>
    %cst_4 = arith.constant 9.765625E-4 : f32
    %8 = vector.broadcast %cst_4 : f32 to vector<1x1x1xf32>
    %9 = arith.mulf %5, %8 : vector<1x1x1xf32>
    %10 = arith.mulf %7, %7 : vector<1x1x1xf32>
    %11 = arith.subf %9, %10 : vector<1x1x1xf32>
    %cst_5 = arith.constant 0.000000e+00 : f32
    %12 = vector.broadcast %cst_5 : f32 to vector<1x1x1xf32>
    %13 = arith.maximumf %11, %12 : vector<1x1x1xf32>
    %cst_6 = arith.constant 9.99999974E-6 : f32
    %14 = vector.broadcast %cst_6 : f32 to vector<1x1x1xf32>
    %15 = arith.addf %13, %14 : vector<1x1x1xf32>
    %16 = math.rsqrt %15 : vector<1x1x1xf32>
    %c0_7 = arith.constant 0 : index
    %c0_8 = arith.constant 0 : index
    %17 = vector.load %arg2[%c0_7, %c0_8] : memref<8x1xf32, #tpu.memory_space<vmem>>, vector<8x1xf32>
    %c0_9 = arith.constant 0 : index
    %c0_10 = arith.constant 0 : index
    %18 = vector.load %arg3[%c0_9, %c0_10] : memref<8x1xf32, #tpu.memory_space<vmem>>, vector<8x1xf32>
    %19 = vector.shape_cast %17 : vector<8x1xf32> to vector<1x8x1xf32>
    %20 = vector.broadcast %16 : vector<1x1x1xf32> to vector<1x8x1xf32>
    %21 = arith.mulf %19, %20 : vector<1x8x1xf32>
    %22 = vector.shape_cast %18 : vector<8x1xf32> to vector<1x8x1xf32>
    %23 = vector.broadcast %7 : vector<1x1x1xf32> to vector<1x8x1xf32>
    %24 = arith.mulf %23, %21 : vector<1x8x1xf32>
    %25 = arith.subf %22, %24 : vector<1x8x1xf32>
    %26 = vector.broadcast %21 : vector<1x8x1xf32> to vector<1x8x128xf32>
    %27 = arith.mulf %0, %26 : vector<1x8x128xf32>
    %28 = vector.broadcast %25 : vector<1x8x1xf32> to vector<1x8x128xf32>
    %29 = arith.addf %27, %28 : vector<1x8x128xf32>
    %c0_11 = arith.constant 0 : index
    %c0_12 = arith.constant 0 : index
    %c0_13 = arith.constant 0 : index
    %30 = vector.load %arg4[%c0_11, %c0_12, %c0_13] : memref<1x8x128xf32, #tpu.memory_space<vmem>>, vector<1x8x128xf32>
    tpu.vector_store %arg4[%c0_11, %c0_12, %c0_13], %29 {strides = array<i32>} : memref<1x8x128xf32, #tpu.memory_space<vmem>>, vector<1x8x128xf32>,
    return
  }
  func.func @transform_0(%arg0: i32) -> (i32, i32, i32) {
    %c0_i32 = arith.constant 0 : i32
    %c0_i32_0 = arith.constant 0 : i32
    %c0_i32_1 = arith.constant 0 : i32
    return %arg0, %c0_i32, %c0_i32_0 : i32, i32, i32
  }
  func.func @transform_1(%arg0: i32) -> (i32, i32) {
    %c0_i32 = arith.constant 0 : i32
    %c0_i32_0 = arith.constant 0 : i32
    %c0_i32_1 = arith.constant 0 : i32
    return %c0_i32, %c0_i32_0 : i32, i32
  }
  func.func @transform_2(%arg0: i32) -> (i32, i32) {
    %c0_i32 = arith.constant 0 : i32
    %c0_i32_0 = arith.constant 0 : i32
    %c0_i32_1 = arith.constant 0 : i32
    return %c0_i32, %c0_i32_0 : i32, i32
  }
  func.func @transform_3(%arg0: i32) -> (i32, i32, i32) {
    %c0_i32 = arith.constant 0 : i32
    %c0_i32_0 = arith.constant 0 : i32
    %c0_i32_1 = arith.constant 0 : i32
    return %arg0, %c0_i32, %c0_i32_0 : i32, i32, i32
  }
}

</mosaic_0001>

<llo_original>
// kernel: tpu_custom_call.1
$region0: #{tpu_custom_call.1}
  #allocation0 [shape = 'u32[]', space=smem, size = 0x4, offset = 0x4, fixed_abs, tag = 'smem constant byte address 0x4 - core index']
  #allocation1 [shape = 'u32[144,128]{1,0:T(1,128)}', space=vmem, size = 0x12000, scoped, tag = 'internal scratch']
  %s0 = inlined_call_operand.hbm [shape: f32[2,8,128], index: 0, kind: input, shape index: {}]
  %s1 = inlined_call_operand.hbm [shape: f32[8,1], index: 1, kind: input, shape index: {}]
  %s2 = inlined_call_operand.hbm [shape: f32[8,1], index: 2, kind: input, shape index: {}]
  %s3 = inlined_call_operand.hbm [shape: f32[2,8,128], index: 3, kind: output, shape index: {}]
  %s4 = sld [smem:[#allocation0]]
  $region57: #{tpu_custom_call.1} parent=0
    _
  %s6 = ssub.s32 1, %s4
  %s7 = scalar_select 0, %s6, %s4
  $region1: #{tpu_custom_call.1} parent=0
    #allocation2 [shape = 'u8[8192]{0}', space=vmem, size = 0x2000, scoped, tag = 'input window, operand 0']
    #allocation3 [shape = 's32[2]{0}', space=sflag, size = 0x8, scoped, tag = 'scoped memory for tpu_custom_call.1']
    #allocation4 [shape = 's32[2]{0}', space=sflag, size = 0x8, scoped, tag = 'scoped memory for tpu_custom_call.1']
    #allocation5 [shape = 'u8[4096]{0}', space=vmem, size = 0x1000, scoped, tag = 'input window, operand 1, single buffered']
    #allocation6 [shape = 's32[1]{0}', space=sflag, size = 0x4, scoped, tag = 'scoped memory for tpu_custom_call.1']
    #allocation7 [shape = 'u8[4096]{0}', space=vmem, size = 0x1000, scoped, tag = 'input window, operand 2, single buffered']
    #allocation8 [shape = 'u8[8192]{0}', space=vmem, size = 0x2000, scoped, tag = 'output window, operand 0']
    %8 = vsyncpa [#allocation3], 0
    %s9 = scalar_lea.sflag [#allocation3], 1
    %10 = vsyncpa %s9, 0
    %11 = vsyncpa [#allocation6], 0
    %12 = vsyncpa [#allocation4], 0
    %s13 = scalar_lea.sflag [#allocation4], 1
    %14 = vsyncpa %s13, 0
    loop: start=0, step=1, limit=4
    $region2: #{tpu_custom_call.1} parent=1 // loop_pre_header
      _
    $region3: #{tpu_custom_call.1} parent=1 // loop_header
      %s16 = sphi 0, %s20
      %p17 = scmp.ge.s32.totalorder %s16, 4
      %s26 = sphi 0, %s28
      %s29 = sphi 0, %s26
      %s30 = sphi 0, %s29
      %s46 = sphi 0, %s30
      %s50 = sphi 0, %s50
      %s52 = sphi 0, %s50
      %s53 = sphi 0, %s52
      %s67 = sphi 0, %s53
      %s71 = sphi 0, %s71
      %s73 = sphi 0, %s71
      %s74 = sphi 0, %s73
      %s88 = sphi 0, %s74
      %s94 = sphi 0, %s96
      %s97 = sphi 0, %s94
      %s98 = sphi 0, %s97
      %s114 = sphi 0, %s98
    $region4: #{tpu_custom_call.1} parent=1 // loop_header_branch
      %19 = sbr.rel (%p17) target = $region8
    $region5: #{tpu_custom_call.1} parent=1 // loop_body
      %s21 = ssub.s32 %s16, 1
      %s22 = ssub.s32 %s16, 2
      %s23 = sadd.s32 %s16, 1
      %s24 = ssub.s32 %s16, %s23
      %p25 = scmp.eq.s32.totalorder %s24, 0
      %s27 = sadd.s32 %s26, 1
      %s28 = scalar_select %p25, %s26, %s27
      %p31 = pneg %p25
      %p32 = scmp.eq.s32.totalorder %s16, 1
      %p33 = por %p31, %p32
      %p34 = scmp.ne.s32.totalorder %s26, %s29
      %p35 = scmp.eq.s32.totalorder %s16, 0
      %p36 = por %p34, %p35
      %p37 = scmp.ne.s32.totalorder %s26, %s29
      %p38 = scmp.eq.s32.totalorder %s21, 1
      %p39 = por %p37, %p38
      %p40 = scmp.ne.s32.totalorder %s29, %s30
      %p41 = scmp.eq.s32.totalorder %s21, 0
      %p42 = por %p40, %p41
      %p43 = scmp.ne.s32.totalorder %s29, %s30
      %p44 = scmp.eq.s32.totalorder %s22, 1
      %p45 = por %p43, %p44
      %p47 = scmp.ne.s32.totalorder %s30, %s46
      %p48 = scmp.eq.s32.totalorder %s22, 0
      %p49 = por %p47, %p48
      %s51 = sadd.s32 %s50, 1
      %p54 = scmp.eq.s32.totalorder %s16, 1
      %p55 = scmp.ne.s32.totalorder %s50, %s52
      %p56 = scmp.eq.s32.totalorder %s16, 0
      %p57 = por %p55, %p56
      %p58 = scmp.ne.s32.totalorder %s50, %s52
      %p59 = scmp.eq.s32.totalorder %s21, 1
      %p60 = por %p58, %p59
      %p61 = scmp.ne.s32.totalorder %s52, %s53
      %p62 = scmp.eq.s32.totalorder %s21, 0
      %p63 = por %p61, %p62
      %p64 = scmp.ne.s32.totalorder %s52, %s53
      %p65 = scmp.eq.s32.totalorder %s22, 1
      %p66 = por %p64, %p65
      %p68 = scmp.ne.s32.totalorder %s53, %s67
      %p69 = scmp.eq.s32.totalorder %s22, 0
      %p70 = por %p68, %p69
      %s72 = sadd.s32 %s71, 1
      %p75 = scmp.eq.s32.totalorder %s16, 1
      %p76 = scmp.ne.s32.totalorder %s71, %s73
      %p77 = scmp.eq.s32.totalorder %s16, 0
      %p78 = por %p76, %p77
      %p79 = scmp.ne.s32.totalorder %s71, %s73
      %p80 = scmp.eq.s32.totalorder %s21, 1
      %p81 = por %p79, %p80
      %p82 = scmp.ne.s32.totalorder %s73, %s74
      %p83 = scmp.eq.s32.totalorder %s21, 0
      %p84 = por %p82, %p83
      %p85 = scmp.ne.s32.totalorder %s73, %s74
      %p86 = scmp.eq.s32.totalorder %s22, 1
      %p87 = por %p85, %p86
      %p89 = scmp.ne.s32.totalorder %s74, %s88
      %p90 = scmp.eq.s32.totalorder %s22, 0
      %p91 = por %p89, %p90
      %s92 = ssub.s32 %s16, %s23
      %p93 = scmp.eq.s32.totalorder %s92, 0
      %s95 = sadd.s32 %s94, 1
      %s96 = scalar_select %p93, %s94, %s95
      %p99 = pneg %p93
      %p100 = scmp.eq.s32.totalorder %s16, 1
      %p101 = por %p99, %p100
      %p102 = scmp.ne.s32.totalorder %s94, %s97
      %p103 = scmp.eq.s32.totalorder %s16, 0
      %p104 = por %p102, %p103
      %p105 = scmp.ne.s32.totalorder %s94, %s97
      %p106 = scmp.eq.s32.totalorder %s21, 1
      %p107 = por %p105, %p106
      %p108 = scmp.ne.s32.totalorder %s97, %s98
      %p109 = scmp.eq.s32.totalorder %s21, 0
      %p110 = por %p108, %p109
      %p111 = scmp.ne.s32.totalorder %s97, %s98
      %p112 = scmp.eq.s32.totalorder %s22, 1
      %p113 = por %p111, %p112
      %p115 = scmp.ne.s32.totalorder %s98, %s114
      %p116 = scmp.eq.s32.totalorder %s22, 0
      %p117 = por %p115, %p116
      %p118 = scmp.le.s32.totalorder 1, %s16
      %p119 = scmp.lt.s32.totalorder %s16, 3
      %p120 = pnand %p118, %p119
      %p121 = pneg %p120
      // Predicated region
      $region9: #{tpu_custom_call.1} parent=5 // pred_check
        _
      $region10: #{tpu_custom_call.1} parent=5 // pred_check_branch
        %123 = sbr.rel (%p120) target = $region12
      $region11: #{tpu_custom_call.1} parent=5 // pred_region
        %s124 = ssub.s32 %s16, 1
        // Predicated region
        $region13: #{tpu_custom_call.1} parent=11 // pred_check
          %p125 = pneg %p63
        $region14: #{tpu_custom_call.1} parent=11 // pred_check_branch
          %127 = sbr.rel (%p125) target = $region16
        $region15: #{tpu_custom_call.1} parent=11 // pred_region
          %s129 = ssub.s32 128, 128
          %130 = vsyncadd [#allocation6], %s129
          %s132 = sshll.u32 [#allocation5], 4
          %s133 = int_to_ptr.vmem [resolvable:$true] %s132
          %135 = dma.hbm_to_vmem [thread:$0]  %s1, 128, %s133, [#allocation6]
        $region16: #{tpu_custom_call.1} parent=11 // pred_fallthru
          _
        // Predicated region
        $region17: #{tpu_custom_call.1} parent=11 // pred_check
          %p136 = pneg %p84
        $region18: #{tpu_custom_call.1} parent=11 // pred_check_branch
          %138 = sbr.rel (%p136) target = $region20
        $region19: #{tpu_custom_call.1} parent=11 // pred_region
          %s140 = ssub.s32 128, 128
          %141 = vsyncadd [#allocation6], %s140
          %s143 = sshll.u32 [#allocation7], 4
          %s144 = int_to_ptr.vmem [resolvable:$true] %s143
          %146 = dma.hbm_to_vmem [thread:$0]  %s2, 128, %s144, [#allocation6]
        $region20: #{tpu_custom_call.1} parent=11 // pred_fallthru
          _
      $region12: #{tpu_custom_call.1} parent=5 // pred_fallthru
        _
      %p147 = scmp.lt.s32.totalorder %s16, 2
      // Predicated region
      $region21: #{tpu_custom_call.1} parent=5 // pred_check
        %p148 = pneg %p147
      $region22: #{tpu_custom_call.1} parent=5 // pred_check_branch
        %150 = sbr.rel (%p148) target = $region24
      $region23: #{tpu_custom_call.1} parent=5 // pred_region
        // Predicated region
        $region25: #{tpu_custom_call.1} parent=23 // pred_check
          %p151 = pneg %p36
        $region26: #{tpu_custom_call.1} parent=23 // pred_check_branch
          %153 = sbr.rel (%p151) target = $region28
        $region27: #{tpu_custom_call.1} parent=23 // pred_region
          %s154 = sand.u32 %s26, 1
          %s155 = scalar_lea.sflag [#allocation3], %s154
          %s156 = sand.u32 %s26, 1
          %s157 = smul.addr %s156, 8
          %s158 = scalar_lea.vmem [#allocation2], %s157
          %s160 = ssub.s32 128, 128
          %161 = vsyncadd %s155, %s160
          %s162 = smul.addr %s16, 128
          %s163 = scalar_lea.hbm %s0, %s162
          %s165 = sshll.u32 %s158, 4
          %s166 = int_to_ptr.vmem [resolvable:$true] %s165
          %168 = dma.hbm_to_vmem [thread:$0]  %s163, 128, %s166, %s155
        $region28: #{tpu_custom_call.1} parent=23 // pred_fallthru
          _
      $region24: #{tpu_custom_call.1} parent=5 // pred_fallthru
        _
      %p169 = scmp.le.s32.totalorder 1, %s16
      %p170 = scmp.lt.s32.totalorder %s16, 3
      %p171 = pnand %p169, %p170
      %p172 = pneg %p171
      // Predicated region
      $region29: #{tpu_custom_call.1} parent=5 // pred_check
        _
      $region30: #{tpu_custom_call.1} parent=5 // pred_check_branch
        %174 = sbr.rel (%p171) target = $region32
      $region31: #{tpu_custom_call.1} parent=5 // pred_region
        %s175 = ssub.s32 %s16, 1
        %s176 = sand.u32 %s29, 1
        %s177 = scalar_lea.sflag [#allocation3], %s176
        %s178 = sand.u32 %s29, 1
        %s179 = smul.addr %s178, 8
        %s180 = scalar_lea.vmem [#allocation2], %s179
        // Predicated region
        $region33: #{tpu_custom_call.1} parent=31 // pred_check
          %p181 = pneg %p42
        $region34: #{tpu_custom_call.1} parent=31 // pred_check_branch
          %183 = sbr.rel (%p181) target = $region36
        $region35: #{tpu_custom_call.1} parent=31 // pred_region
          %184 = dma.done %s177, 128
        $region36: #{tpu_custom_call.1} parent=31 // pred_fallthru
          _
        // Predicated region
        $region37: #{tpu_custom_call.1} parent=31 // pred_check
          %p185 = pneg %p63
        $region38: #{tpu_custom_call.1} parent=31 // pred_check_branch
          %187 = sbr.rel (%p185) target = $region40
        $region39: #{tpu_custom_call.1} parent=31 // pred_region
          %188 = dma.done [#allocation6], 128
        $region40: #{tpu_custom_call.1} parent=31 // pred_fallthru
          _
        // Predicated region
        $region41: #{tpu_custom_call.1} parent=31 // pred_check
          %p189 = pneg %p84
        $region42: #{tpu_custom_call.1} parent=31 // pred_check_branch
          %191 = sbr.rel (%p189) target = $region44
        $region43: #{tpu_custom_call.1} parent=31 // pred_region
          %192 = dma.done [#allocation6], 128
        $region44: #{tpu_custom_call.1} parent=31 // pred_fallthru
          _
        %s193 = sand.u32 %s29, 1
        %s194 = scalar_lea.sflag [#allocation3], %s193
        %s195 = sand.u32 %s29, 1
        %s196 = smul.addr %s195, 8
        %s197 = scalar_lea.vmem [#allocation2], %s196
        %p198 = pneg %p42
        %p199 = pneg %p39
        %p200 = pneg %p63
        %p201 = pneg %p60
        %p202 = pneg %p84
        %p203 = pneg %p81
        %p204 = pneg %p110
        %p205 = pneg %p107
        %s206 = sand.u32 %s97, 1
        %s207 = scalar_lea.sflag [#allocation4], %s206
        %s208 = sand.u32 %s97, 1
        %s209 = smul.addr %s208, 8
        %s210 = scalar_lea.vmem [#allocation8], %s209
        %v211 = vld [vmem:[%s180] sm:$0xff]
        %212 = vadd.xlane.f32.xlu0 %v211
        %v213 = vpop.xlane.xlu0 %212
        %v214 = vrot.slane %v213, 4
        %v215 = vadd.f32 %v213, %v214
        %v216 = vrot.slane %v215, 2
        %v217 = vadd.f32 %v215, %v216
        %v218 = vrot.slane %v217, 1
        %v219 = vadd.f32 %v217, %v218
        %v220 = vmul.f32 %v211, %v211
        %221 = vadd.xlane.f32.xlu0 %v220
        %v222 = vpop.xlane.xlu0 %221
        %v223 = vrot.slane %v222, 4
        %v224 = vadd.f32 %v222, %v223
        %v225 = vrot.slane %v224, 2
        %v226 = vadd.f32 %v224, %v225
        %v227 = vrot.slane %v226, 1
        %v228 = vadd.f32 %v226, %v227
        %v229 = vmul.f32 %v219, 0.0009765625
        %v230 = vmul.f32 %v228, 0.0009765625
        %v231 = vmul.f32 %v229, %v229
        %v232 = vsub.f32 %v230, %v231
        %v233 = vmax.f32 %v232, 0.0
        %v234 = vadd.f32 %v233, 1e-05
        %v235 = vrsqrt.pop %v234
        %v236 = vld [vmem:[#allocation5] sm:$0xff]
        %v237 = vld [vmem:[#allocation7] sm:$0xff]
        %v238 = vmul.f32 %v236, %v235
        %v239 = vmul.f32 %v229, %v238
        %v240 = vsub.f32 %v237, %v239
        %242 = vset.pattern.permute.xlu0 0
        %243 = vperm.xlu0 %242, %v238
        %v244 = vpop.permute.xlu0 %243
        %v246 = vmul.f32 %v211, %v244
        %248 = vset.pattern.permute.xlu0 0
        %249 = vperm.xlu0 %248, %v240
        %v250 = vpop.permute.xlu0 %249
        %v252 = vadd.f32 %v246, %v250
        %253 = vst [vmem:[%s210] sm:$0xff] %v252
        %s254 = sand.u32 %s97, 1
        %s255 = scalar_lea.sflag [#allocation4], %s254
        %s256 = sand.u32 %s97, 1
        %s257 = smul.addr %s256, 8
        %s258 = scalar_lea.vmem [#allocation8], %s257
        // Predicated region
        $region45: #{tpu_custom_call.1} parent=31 // pred_check
          %p259 = pneg %p107
        $region46: #{tpu_custom_call.1} parent=31 // pred_check_branch
          %261 = sbr.rel (%p259) target = $region48
        $region47: #{tpu_custom_call.1} parent=31 // pred_region
          %s263 = ssub.s32 128, 128
          %264 = vsyncadd %s255, %s263
          %s265 = smul.addr %s21, 128
          %s266 = scalar_lea.hbm %s3, %s265
          %s268 = sshll.u32 %s258, 4
          %s269 = int_to_ptr.vmem [resolvable:$true] %s268
          %271 = dma.vmem_to_hbm [thread:$0]  %s269, 128, %s266, %s255
        $region48: #{tpu_custom_call.1} parent=31 // pred_fallthru
          _
      $region32: #{tpu_custom_call.1} parent=5 // pred_fallthru
        _
      %p272 = scmp.le.s32.totalorder 2, %s16
      // Predicated region
      $region49: #{tpu_custom_call.1} parent=5 // pred_check
        %p273 = pneg %p272
      $region50: #{tpu_custom_call.1} parent=5 // pred_check_branch
        %275 = sbr.rel (%p273) target = $region52
      $region51: #{tpu_custom_call.1} parent=5 // pred_region
        %s276 = ssub.s32 %s16, 2
        // Predicated region
        $region53: #{tpu_custom_call.1} parent=51 // pred_check
          %p277 = pneg %p113
        $region54: #{tpu_custom_call.1} parent=51 // pred_check_branch
          %279 = sbr.rel (%p277) target = $region56
        $region55: #{tpu_custom_call.1} parent=51 // pred_region
          %s280 = sand.u32 %s98, 1
          %s281 = scalar_lea.sflag [#allocation4], %s280
          %s282 = sand.u32 %s98, 1
          %s283 = smul.addr %s282, 8
          %s284 = scalar_lea.vmem [#allocation8], %s283
          %285 = dma.done %s281, 128
        $region56: #{tpu_custom_call.1} parent=51 // pred_fallthru
          _
      $region52: #{tpu_custom_call.1} parent=5 // pred_fallthru
        _
    $region6: #{tpu_custom_call.1} parent=1 // loop_footer
      %s20 = sadd.s32 1, %s16
    $region7: #{tpu_custom_call.1} parent=1 // loop_footer_branch
      %15 = sbr.rel target = $region3
    $region8: #{tpu_custom_call.1} parent=1 // loop_exit
      _
    %286 = vsyncpa [#allocation3], 1
    %s287 = scalar_lea.sflag [#allocation3], 1
    %288 = vsyncpa %s287, 1
    %289 = vsyncpa [#allocation6], 1
    %290 = vsyncpa [#allocation4], 1
    %s291 = scalar_lea.sflag [#allocation4], 1
    %292 = vsyncpa %s291, 1

</llo_original>
